<compile_context>
chip_gen: v5e
topology: v5e:2x2
jax: 0.10.0
libtpu: 0.0.40
codegen_flags: <defaults>
</compile_context>

<pallas_src>
import jax
import jax.numpy as jnp
from jax.experimental import pallas as pl
from jax.experimental.pallas import tpu as pltpu


def _round_up(x, m):
    return ((x + m - 1) // m) * m


def _largest_dividing_tile(extent, max_tile, base):
    """Largest multiple of `base` that divides `extent` and is <= max_tile.

    `extent` must be a positive multiple of `base`.
    """
    t = min(max_tile, extent)
    t -= t % base
    while t > base and extent % t:
        t -= base
    return max(t, base)


def _split_tile(extent, base):
    """Largest multiple of `base` dividing `extent` with extent//tile >= 2."""
    if extent < 2 * base:
        return None
    return _largest_dividing_tile(extent, extent // 2, base)


# ---------------------------------------------------------------------------
# Kernel
# ---------------------------------------------------------------------------
def _linear_kernel(x_ref, w_ref, b_ref, o_ref, acc_ref):
    # x_ref:   (tm, tk) tile of flattened activations
    # w_ref:   (tk, tn) tile of the pre-transposed weight
    # b_ref:   (1, tn)  bias row tile (f32)
    # o_ref:   (tm, tn) output tile (resident across the K axis)
    # acc_ref: (tm, tn) float32 accumulator scratch
    k = pl.program_id(2)

    @pl.when(k == 0)
    def _():
        # Fold the bias into the accumulator init -> no epilogue add pass.
        acc_ref[...] = jnp.broadcast_to(b_ref[...].astype(jnp.float32),
                                        acc_ref.shape)

    acc_ref[...] += jnp.dot(x_ref[...], w_ref[...],
                            preferred_element_type=jnp.float32)

    @pl.when(k == pl.num_programs(2) - 1)
    def _():
        o_ref[...] = acc_ref[...].astype(o_ref.dtype)


def pallas_linear_padded(x_pad, wT_pad, b_pad, *, tm, tn, tk, out_dtype):
    """y_pad = x_pad @ wT_pad + b_pad on a (M//tm, N//tn, K//tk) grid.

    All inputs are already padded so that tm | Mp, tn | Np, tk | Kp.
    """
    Mp, Kp = x_pad.shape
    _, Np = wT_pad.shape
    grid = (Mp // tm, Np // tn, Kp // tk)

    in_itemsize = x_pad.dtype.itemsize
    w_itemsize = wT_pad.dtype.itemsize
    out_itemsize = jnp.dtype(out_dtype).itemsize

    # Account for re-streaming: x is read (Np//tn) times, W (Mp//tm) times.
    cost = pl.CostEstimate(
        flops=2 * Mp * Kp * Np,
        transcendentals=0,
        bytes_accessed=int(x_pad.size * in_itemsize * (Np // tn)
                           + wT_pad.size * w_itemsize * (Mp // tm)
                           + Mp * Np * out_itemsize),
    )

    # Double-buffered x, W, out, bias + f32 accumulator footprint.
    need = (2 * tm * tk * in_itemsize
            + 2 * tk * tn * w_itemsize
            + 2 * tm * tn * out_itemsize
            + 2 * tn * 4
            + tm * tn * 4)
    vmem_limit = int(min(max(32 * 1024 * 1024, 2 * need), 64 * 1024 * 1024))

    return pl.pallas_call(
        _linear_kernel,
        out_shape=jax.ShapeDtypeStruct((Mp, Np), out_dtype),
        grid_spec=pltpu.PrefetchScalarGridSpec(
            num_scalar_prefetch=0,
            grid=grid,
            in_specs=[
                pl.BlockSpec((tm, tk), lambda i, j, k: (i, k)),
                pl.BlockSpec((tk, tn), lambda i, j, k: (k, j)),
                pl.BlockSpec((1, tn), lambda i, j, k: (0, j)),
            ],
            out_specs=pl.BlockSpec((tm, tn), lambda i, j, k: (i, j)),
            scratch_shapes=[pltpu.VMEM((tm, tn), jnp.float32)],
        ),
        compiler_params=pltpu.CompilerParams(
            # M and N shard across TensorCores (v7x megacore); K is reduction.
            dimension_semantics=("parallel", "parallel", "arbitrary"),
            vmem_limit_bytes=vmem_limit,
        ),
        cost_estimate=cost,
    )(x_pad, wT_pad, b_pad)


# ---------------------------------------------------------------------------
# Module
# ---------------------------------------------------------------------------
class SpikeLinear:
    """JAX/Pallas port of the PyTorch SpikeLinear module (forward only)."""

    def __init__(self, weight, bias, step=2, *, compute_dtype=jnp.bfloat16,
                 max_tm=512, max_tn=1024, max_tk=512, min_pallas_rows=16):
        # weight: (C_out, C_in), bias: (C_out,)
        self.weight = weight
        self.bias = bias
        self.step = step
        self._spiking = False

        self.out_features, self.in_features = weight.shape
        # compute_dtype=bf16 -> bf16 MXU feed, f32 accumulation (default).
        # compute_dtype=f32  -> bit-exact vs. an f32 reference.
        self.compute_dtype = jnp.dtype(compute_dtype)
        # sublane packing: 8 rows/f32, 16 rows/bf16, 32 rows/int8-fp8.
        self._base_m = max(8, 32 // self.compute_dtype.itemsize)

        self.max_tm = max_tm
        self.min_pallas_rows = min_pallas_rows

        K, N = self.in_features, self.out_features
        # Pad K/N only to the 128-lane granule (NOT up to the tile size).
        self.Kp = _round_up(K, 128)
        self.Np = _round_up(N, 128)
        # Largest lane-dense tiles that divide the padded extents.
        self.tk = _largest_dividing_tile(self.Kp, max_tk, 128)
        self.tn = _largest_dividing_tile(self.Np, max_tn, 128)

        # Pre-transpose + zero-pad the weight ONCE (no per-call weight.T).
        wT = jnp.zeros((self.Kp, self.Np), self.compute_dtype)
        wT = wT.at[:K, :N].set(weight.T.astype(self.compute_dtype))
        self.wT_pad = wT
        # TODO(synk): fp8 weight path for v7x quantized inference (int8 only
        # makes sense on v5e/v6e MXUs).

        b = jnp.zeros((1, self.Np), jnp.float32)
        b = b.at[:, :N].set(bias.astype(jnp.float32))
        self.b_pad = b

    def set_spike_state(self, use_spike=True):
        self._spiking = use_spike

    # -- y = x2d @ W^T + b ---------------------------------------------------
    def _linear(self, x2d):
        M, K = x2d.shape
        N = self.out_features
        out_dtype = x2d.dtype

        if M < self.min_pallas_rows:
            # Tiny M: a pallas_call would be pure launch/pipeline overhead.
            y = jnp.dot(x2d.astype(self.compute_dtype), self.wT_pad[:K, :N],
                        preferred_element_type=jnp.float32)
            return (y + self.b_pad[:, :N]).astype(out_dtype)

        base_m = self._base_m
        if M <= self.max_tm:
            # Common SNN case: single M block -> weight streamed exactly once.
            Mp = _round_up(M, base_m)
            tm = Mp
        else:
            Mp = _round_up(M, 128)
            tm = _largest_dividing_tile(Mp, self.max_tm, base_m)

        tn = self.tn
        tk = self.tk

        # v7x megacore: make sure >= 1 parallel grid axis has >= 2 tiles so
        # both TensorCores get work.
        if Mp // tm == 1 and self.Np // tn == 1:
            tn_split = _split_tile(self.Np, 128)
            if tn_split is not None:
                tn = tn_split
            else:
                tm_split = _split_tile(Mp, base_m)
                if tm_split is not None:
                    tm = tm_split

        x2d = x2d.astype(self.compute_dtype)
        if Mp != M or self.Kp != K:
            x_pad = jnp.pad(x2d, ((0, Mp - M), (0, self.Kp - K)))
        else:
            x_pad = x2d

        y = pallas_linear_padded(x_pad, self.wT_pad, self.b_pad,
                                 tm=tm, tn=tn, tk=tk, out_dtype=out_dtype)
        return y[:M, :N]

    def __call__(self, x):
        if not self._spiking:
            # non-spiking: plain Linear over the last dim (any leading dims)
            lead = x.shape[:-1]
            C = x.shape[-1]
            out = self._linear(x.reshape(-1, C))
            return out.reshape(*lead, self.out_features)
        # spiking: x is (T, B, C) -> flatten -> Linear -> (T, B, C_out)
        T, B, C = x.shape
        out = self._linear(x.reshape(T * B, C))
        return out.reshape(T, B, self.out_features)


def init_linear_params(key, in_features, out_features):
    # deterministic init mimicking nn.Linear (uniform(-1/sqrt(fan_in), +))
    kw, kb = jax.random.split(key)
    bound = 1.0 / (in_features ** 0.5)
    weight = jax.random.uniform(kw, (out_features, in_features),
                                jnp.float32, -bound, bound)
    bias = jax.random.uniform(kb, (out_features,), jnp.float32, -bound, bound)
    return weight, bias


if __name__ == "__main__":
    key = jax.random.PRNGKey(0)
    k_x, k_p = jax.random.split(key)

    # Deliberately un-aligned small shapes to exercise padding/tiling:
    # M = T*B = 60 (pads to 64), K = 100 (pads to 128), N = 96 (pads to 128).
    T, B, C_in, C_out = 3, 20, 100, 96
    x = jax.random.normal(k_x, (T, B, C_in), jnp.float32)

    weight, bias = init_linear_params(k_p, C_in, C_out)

    # pure-JAX f32 reference
    ref = (x.reshape(-1, C_in) @ weight.T + bias).reshape(T, B, C_out)

    # ---- default layer: bf16 MXU feed, f32 accumulation --------------------
    layer = SpikeLinear(weight, bias, step=T)

    layer.set_spike_state(True)          # spiking path
    out_spike = jax.block_until_ready(layer(x))

    layer.set_spike_state(False)         # non-spiking path (Linear on last dim)
    out_plain = jax.block_until_ready(layer(x))

    assert out_spike.shape == (T, B, C_out)
    assert out_plain.shape == (T, B, C_out)
    assert out_spike.dtype == x.dtype and out_plain.dtype == x.dtype
    # bf16 operands (f32 accumulation) -> loose tolerance vs the f32 reference
    assert jnp.allclose(out_spike, ref, atol=5e-2, rtol=5e-2)
    assert jnp.allclose(out_plain, ref, atol=5e-2, rtol=5e-2)

    # ---- exactness check: f32 compute path ----------------------------------
    layer_f32 = SpikeLinear(weight, bias, step=T, compute_dtype=jnp.float32)
    layer_f32.set_spike_state(True)
    out_f32 = jax.block_until_ready(layer_f32(x))
    assert jnp.allclose(out_f32, ref, atol=1e-5)

    print("KERNEL_OK")
</pallas_src>

<mosaic_0001>
module attributes {stable_mosaic.version = 11 : i64} {
  func.func @_linear_kernel(%arg0: i32, %arg1: i32, %arg2: i32, %arg3: memref<32x128xbf16, #tpu.memory_space<vmem>>, %arg4: memref<128x128xbf16, #tpu.memory_space<vmem>>, %arg5: memref<1x128xf32, #tpu.memory_space<vmem>>, %arg6: memref<32x128xf32, #tpu.memory_space<vmem>>, %arg7: memref<32x128xf32, #tpu.memory_space<vmem>>) attributes {dimension_semantics = [#tpu.dimension_semantics<parallel>, #tpu.dimension_semantics<parallel>, #tpu.dimension_semantics<arbitrary>], iteration_bounds = array<i64: 2, 1, 1>, scalar_prefetch = 0 : i64, scratch_operands = 1 : i64, tpu.core_type = #tpu.core_type<tc>, window_params = [{transform_indices = @transform_0, window_bounds = array<i64: 32, 128>}, {transform_indices = @transform_1, window_bounds = array<i64: 128, 128>}, {transform_indices = @transform_2, window_bounds = array<i64: 1, 128>}, {transform_indices = @transform_3, window_bounds = array<i64: 32, 128>}]} {
    %c0_i32 = arith.constant 0 : i32
    %0 = arith.cmpi eq, %arg2, %c0_i32 : i32
    %1 = arith.extui %0 : i1 to i32
    %c0_i32_0 = arith.constant 0 : i32
    %2 = arith.cmpi ne, %1, %c0_i32_0 : i32
    scf.if %2 {
      %c0_10 = arith.constant 0 : index
      %c0_11 = arith.constant 0 : index
      %12 = vector.load %arg5[%c0_10, %c0_11] : memref<1x128xf32, #tpu.memory_space<vmem>>, vector<1x128xf32>
      %13 = vector.shape_cast %12 : vector<1x128xf32> to vector<1x128xf32>
      %14 = vector.broadcast %13 : vector<1x128xf32> to vector<32x128xf32>
      %c0_12 = arith.constant 0 : index
      %c0_13 = arith.constant 0 : index
      %15 = vector.load %arg7[%c0_12, %c0_13] : memref<32x128xf32, #tpu.memory_space<vmem>>, vector<32x128xf32>
      tpu.vector_store %arg7[%c0_12, %c0_13], %14 {strides = array<i32>} : memref<32x128xf32, #tpu.memory_space<vmem>>, vector<32x128xf32>,
    } else {
    }
    %c0 = arith.constant 0 : index
    %c0_1 = arith.constant 0 : index
    %3 = vector.load %arg7[%c0, %c0_1] : memref<32x128xf32, #tpu.memory_space<vmem>>, vector<32x128xf32>
    %c0_2 = arith.constant 0 : index
    %c0_3 = arith.constant 0 : index
    %4 = vector.load %arg3[%c0_2, %c0_3] : memref<32x128xbf16, #tpu.memory_space<vmem>>, vector<32x128xbf16>
    %c0_4 = arith.constant 0 : index
    %c0_5 = arith.constant 0 : index
    %5 = vector.load %arg4[%c0_4, %c0_5] : memref<128x128xbf16, #tpu.memory_space<vmem>>, vector<128x128xbf16>
    %cst = arith.constant dense<0.000000e+00> : vector<32x128xf32>
    %6 = tpu.matmul %4, %5, %cst {dimension_numbers = #tpu.dot_dimension_numbers<[1], [0], [0], [1], [0, 0, 1, 1], [], []>} : vector<32x128xbf16>, vector<128x128xbf16>, vector<32x128xf32> -> vector<32x128xf32>
    %7 = arith.addf %3, %6 : vector<32x128xf32>
    %c0_6 = arith.constant 0 : index
    %c0_7 = arith.constant 0 : index
    %8 = vector.load %arg7[%c0_6, %c0_7] : memref<32x128xf32, #tpu.memory_space<vmem>>, vector<32x128xf32>
    tpu.vector_store %arg7[%c0_6, %c0_7], %7 {strides = array<i32>} : memref<32x128xf32, #tpu.memory_space<vmem>>, vector<32x128xf32>,
    %c0_i32_8 = arith.constant 0 : i32
    %9 = arith.cmpi eq, %arg2, %c0_i32_8 : i32
    %10 = arith.extui %9 : i1 to i32
    %c0_i32_9 = arith.constant 0 : i32
    %11 = arith.cmpi ne, %10, %c0_i32_9 : i32
    scf.if %11 {
      %c0_10 = arith.constant 0 : index
      %c0_11 = arith.constant 0 : index
      %12 = vector.load %arg7[%c0_10, %c0_11] : memref<32x128xf32, #tpu.memory_space<vmem>>, vector<32x128xf32>
      %c0_12 = arith.constant 0 : index
      %c0_13 = arith.constant 0 : index
      %13 = vector.load %arg6[%c0_12, %c0_13] : memref<32x128xf32, #tpu.memory_space<vmem>>, vector<32x128xf32>
      tpu.vector_store %arg6[%c0_12, %c0_13], %12 {strides = array<i32>} : memref<32x128xf32, #tpu.memory_space<vmem>>, vector<32x128xf32>,
    } else {
    }
    return
  }
  func.func @transform_0(%arg0: i32, %arg1: i32, %arg2: i32) -> (i32, i32) {
    %c0_i32 = arith.constant 0 : i32
    return %arg0, %arg2 : i32, i32
  }
  func.func @transform_1(%arg0: i32, %arg1: i32, %arg2: i32) -> (i32, i32) {
    %c0_i32 = arith.constant 0 : i32
    return %arg2, %arg1 : i32, i32
  }
  func.func @transform_2(%arg0: i32, %arg1: i32, %arg2: i32) -> (i32, i32) {
    %c0_i32 = arith.constant 0 : i32
    %c0_i32_0 = arith.constant 0 : i32
    return %c0_i32, %arg1 : i32, i32
  }
  func.func @transform_3(%arg0: i32, %arg1: i32, %arg2: i32) -> (i32, i32) {
    %c0_i32 = arith.constant 0 : i32
    return %arg0, %arg1 : i32, i32
  }
}

</mosaic_0001>

<llo_original>
// kernel: tpu_custom_call.1
$region0: #{tpu_custom_call.1}
  #allocation0 [shape = 'u32[]', space=smem, size = 0x4, offset = 0x4, fixed_abs, tag = 'smem constant byte address 0x4 - core index']
  #allocation1 [shape = 'u32[72,128]{1,0:T(1,128)}', space=vmem, size = 0x9000, scoped, tag = 'internal scratch']
  #allocation2 [shape = 'f32[32,128]{1,0:T(8,128)}', space=vmem, size = 0x4000, scoped, tag = 'scratch operand']
  %s0 = inlined_call_operand.hbm [shape: bf16[64,128], index: 0, kind: input, shape index: {}]
  %s1 = inlined_call_operand.hbm [shape: bf16[128,128], index: 1, kind: input, shape index: {}]
  %s2 = inlined_call_operand.vmem [shape: f32[1,128], index: 2, kind: input, shape index: {}]
  %s3 = inlined_call_operand.hbm [shape: f32[64,128], index: 3, kind: output, shape index: {}]
  %s4 = sld [smem:[#allocation0]]
  $region61: #{tpu_custom_call.1} parent=0
    _
  %s6 = ssub.s32 1, %s4
  %s7 = scalar_select 0, %s6, %s4
  $region1: #{tpu_custom_call.1} parent=0
    #allocation3 [shape = 'u8[16384]{0}', space=vmem, size = 0x4000, scoped, tag = 'input window, operand 0']
    #allocation4 [shape = 's32[2]{0}', space=sflag, size = 0x8, scoped, tag = 'scoped memory for tpu_custom_call.1']
    #allocation5 [shape = 's32[2]{0}', space=sflag, size = 0x8, scoped, tag = 'scoped memory for tpu_custom_call.1']
    #allocation6 [shape = 'u8[32768]{0}', space=vmem, size = 0x8000, scoped, tag = 'input window, operand 1, single buffered']
    #allocation7 [shape = 's32[1]{0}', space=sflag, size = 0x4, scoped, tag = 'scoped memory for tpu_custom_call.1']
    #allocation8 [shape = 'u8[32768]{0}', space=vmem, size = 0x8000, scoped, tag = 'output window, operand 0']
    %8 = vsyncpa [#allocation4], 0
    %s9 = scalar_lea.sflag [#allocation4], 1
    %10 = vsyncpa %s9, 0
    %11 = vsyncpa [#allocation7], 0
    %12 = vsyncpa [#allocation5], 0
    %s13 = scalar_lea.sflag [#allocation5], 1
    %14 = vsyncpa %s13, 0
    loop: start=0, step=1, limit=4
    $region2: #{tpu_custom_call.1} parent=1 // loop_pre_header
      _
    $region3: #{tpu_custom_call.1} parent=1 // loop_header
      %s16 = sphi 0, %s20
      %p17 = scmp.ge.s32.totalorder %s16, 4
      %s23 = sphi 0, %s42
      %s24 = sphi 0, %s38
      %s25 = sphi 0, %s34
      %s26 = sphi 0, %s23
      %s27 = sphi 0, %s24
      %s28 = sphi 0, %s25
      %s29 = sphi 0, %s26
      %s30 = sphi 0, %s27
      %s31 = sphi 0, %s28
      %s47 = sphi 0, %s49
      %s50 = sphi 0, %s47
      %s51 = sphi 0, %s50
      %s67 = sphi 0, %s51
      %s75 = sphi 0, %s77
      %s78 = sphi 0, %s75
      %s79 = sphi 0, %s78
      %s95 = sphi 0, %s79
      %s101 = sphi 0, %s103
      %s104 = sphi 0, %s101
      %s105 = sphi 0, %s104
      %s121 = sphi 0, %s105
      %s129 = sphi 0, %s131
      %s132 = sphi 0, %s129
      %s133 = sphi 0, %s132
      %s149 = sphi 0, %s133
    $region4: #{tpu_custom_call.1} parent=1 // loop_header_branch
      %19 = sbr.rel (%p17) target = $region8
    $region5: #{tpu_custom_call.1} parent=1 // loop_body
      %s21 = ssub.s32 %s16, 1
      %s22 = ssub.s32 %s16, 2
      %s32 = sadd.s32 1, %s25
      %p33 = scmp.ge.s32.totalorder %s32, 1
      %s34 = scalar_select %p33, 0, %s32
      %s35 = sadd.s32 1, %s24
      %s36 = scalar_select %p33, %s35, %s24
      %p37 = scmp.ge.s32.totalorder %s36, 1
      %s38 = scalar_select %p37, 0, %s36
      %s39 = sadd.s32 1, %s23
      %s40 = scalar_select %p37, %s39, %s23
      %p41 = scmp.ge.s32.totalorder %s40, 2
      %s42 = scalar_select %p41, 0, %s40
      %s43 = ssub.s32 %s23, %s42
      %s44 = ssub.s32 %s25, %s34
      %s45 = sor.u32 %s43, %s44
      %p46 = scmp.eq.s32.totalorder %s45, 0
      %s48 = sadd.s32 %s47, 1
      %s49 = scalar_select %p46, %s47, %s48
      %p52 = pneg %p46
      %p53 = scmp.eq.s32.totalorder %s16, 1
      %p54 = por %p52, %p53
      %p55 = scmp.ne.s32.totalorder %s47, %s50
      %p56 = scmp.eq.s32.totalorder %s16, 0
      %p57 = por %p55, %p56
      %p58 = scmp.ne.s32.totalorder %s47, %s50
      %p59 = scmp.eq.s32.totalorder %s21, 1
      %p60 = por %p58, %p59
      %p61 = scmp.ne.s32.totalorder %s50, %s51
      %p62 = scmp.eq.s32.totalorder %s21, 0
      %p63 = por %p61, %p62
      %p64 = scmp.ne.s32.totalorder %s50, %s51
      %p65 = scmp.eq.s32.totalorder %s22, 1
      %p66 = por %p64, %p65
      %p68 = scmp.ne.s32.totalorder %s51, %s67
      %p69 = scmp.eq.s32.totalorder %s22, 0
      %p70 = por %p68, %p69
      %s71 = ssub.s32 %s25, %s34
      %s72 = ssub.s32 %s24, %s38
      %s73 = sor.u32 %s71, %s72
      %p74 = scmp.eq.s32.totalorder %s73, 0
      %s76 = sadd.s32 %s75, 1
      %s77 = scalar_select %p74, %s75, %s76
      %p80 = pneg %p74
      %p81 = scmp.eq.s32.totalorder %s16, 1
      %p82 = por %p80, %p81
      %p83 = scmp.ne.s32.totalorder %s75, %s78
      %p84 = scmp.eq.s32.totalorder %s16, 0
      %p85 = por %p83, %p84
      %p86 = scmp.ne.s32.totalorder %s75, %s78
      %p87 = scmp.eq.s32.totalorder %s21, 1
      %p88 = por %p86, %p87
      %p89 = scmp.ne.s32.totalorder %s78, %s79
      %p90 = scmp.eq.s32.totalorder %s21, 0
      %p91 = por %p89, %p90
      %p92 = scmp.ne.s32.totalorder %s78, %s79
      %p93 = scmp.eq.s32.totalorder %s22, 1
      %p94 = por %p92, %p93
      %p96 = scmp.ne.s32.totalorder %s79, %s95
      %p97 = scmp.eq.s32.totalorder %s22, 0
      %p98 = por %p96, %p97
      %s99 = ssub.s32 %s24, %s38
      %p100 = scmp.eq.s32.totalorder %s99, 0
      %s102 = sadd.s32 %s101, 1
      %s103 = scalar_select %p100, %s101, %s102
      %p106 = pneg %p100
      %p107 = scmp.eq.s32.totalorder %s16, 1
      %p108 = por %p106, %p107
      %p109 = scmp.ne.s32.totalorder %s101, %s104
      %p110 = scmp.eq.s32.totalorder %s16, 0
      %p111 = por %p109, %p110
      %p112 = scmp.ne.s32.totalorder %s101, %s104
      %p113 = scmp.eq.s32.totalorder %s21, 1
      %p114 = por %p112, %p113
      %p115 = scmp.ne.s32.totalorder %s104, %s105
      %p116 = scmp.eq.s32.totalorder %s21, 0
      %p117 = por %p115, %p116
      %p118 = scmp.ne.s32.totalorder %s104, %s105
      %p119 = scmp.eq.s32.totalorder %s22, 1
      %p120 = por %p118, %p119
      %p122 = scmp.ne.s32.totalorder %s105, %s121
      %p123 = scmp.eq.s32.totalorder %s22, 0
      %p124 = por %p122, %p123
      %s125 = ssub.s32 %s23, %s42
      %s126 = ssub.s32 %s24, %s38
      %s127 = sor.u32 %s125, %s126
      %p128 = scmp.eq.s32.totalorder %s127, 0
      %s130 = sadd.s32 %s129, 1
      %s131 = scalar_select %p128, %s129, %s130
      %p134 = pneg %p128
      %p135 = scmp.eq.s32.totalorder %s16, 1
      %p136 = por %p134, %p135
      %p137 = scmp.ne.s32.totalorder %s129, %s132
      %p138 = scmp.eq.s32.totalorder %s16, 0
      %p139 = por %p137, %p138
      %p140 = scmp.ne.s32.totalorder %s129, %s132
      %p141 = scmp.eq.s32.totalorder %s21, 1
      %p142 = por %p140, %p141
      %p143 = scmp.ne.s32.totalorder %s132, %s133
      %p144 = scmp.eq.s32.totalorder %s21, 0
      %p145 = por %p143, %p144
      %p146 = scmp.ne.s32.totalorder %s132, %s133
      %p147 = scmp.eq.s32.totalorder %s22, 1
      %p148 = por %p146, %p147
      %p150 = scmp.ne.s32.totalorder %s133, %s149
      %p151 = scmp.eq.s32.totalorder %s22, 0
      %p152 = por %p150, %p151
      %p153 = scmp.le.s32.totalorder 1, %s16
      %p154 = scmp.lt.s32.totalorder %s16, 3
      %p155 = pnand %p153, %p154
      %p156 = pneg %p155
      // Predicated region
      $region9: #{tpu_custom_call.1} parent=5 // pred_check
        _
      $region10: #{tpu_custom_call.1} parent=5 // pred_check_branch
        %158 = sbr.rel (%p155) target = $region12
      $region11: #{tpu_custom_call.1} parent=5 // pred_region
        %s159 = ssub.s32 %s16, 1
        // Predicated region
        $region13: #{tpu_custom_call.1} parent=11 // pred_check
          %p160 = pneg %p91
        $region14: #{tpu_custom_call.1} parent=11 // pred_check_branch
          %162 = sbr.rel (%p160) target = $region16
        $region15: #{tpu_custom_call.1} parent=11 // pred_region
          %s163 = smul.u32 16, %s28
          %165 = vsyncadd [#allocation7], 0
          %s166 = sadd.s32 %s27, %s163
          %s167 = smul.addr %s166, 4
          %s168 = scalar_lea.hbm %s1, %s167
          %s169 = sshll.u32 %s168, 4
          %s170 = int_to_ptr.hbm [resolvable:$true] %s169
          %s171 = sshll.u32 [#allocation6], 4
          %s172 = int_to_ptr.vmem [resolvable:$true] %s171
          %177 = dma.hbm_to_vmem [thread:$0]  %s170, 1024, %s172, [#allocation7], 64, 64, 4
        $region16: #{tpu_custom_call.1} parent=11 // pred_fallthru
          _
        // Predicated region
        $region17: #{tpu_custom_call.1} parent=11 // pred_check
          %p178 = pneg %p117
        $region18: #{tpu_custom_call.1} parent=11 // pred_check_branch
          %180 = sbr.rel (%p178) target = $region20
        $region19: #{tpu_custom_call.1} parent=11 // pred_region
          %p181 = scmp.lt.s32.totalorder %s27, 0
          %s182 = scalar_select %p181, %s27, 0
          %s183 = scalar_lea.vmem %s2, %s182
        $region20: #{tpu_custom_call.1} parent=11 // pred_fallthru
          _
      $region12: #{tpu_custom_call.1} parent=5 // pred_fallthru
        _
      %p184 = scmp.lt.s32.totalorder %s16, 2
      // Predicated region
      $region21: #{tpu_custom_call.1} parent=5 // pred_check
        %p185 = pneg %p184
      $region22: #{tpu_custom_call.1} parent=5 // pred_check_branch
        %187 = sbr.rel (%p185) target = $region24
      $region23: #{tpu_custom_call.1} parent=5 // pred_region
        // Predicated region
        $region25: #{tpu_custom_call.1} parent=23 // pred_check
          %p188 = pneg %p57
        $region26: #{tpu_custom_call.1} parent=23 // pred_check_branch
          %190 = sbr.rel (%p188) target = $region28
        $region27: #{tpu_custom_call.1} parent=23 // pred_region
          %s191 = sand.u32 %s47, 1
          %s192 = scalar_lea.sflag [#allocation4], %s191
          %s193 = sand.u32 %s47, 1
          %s194 = smul.addr %s193, 16
          %s195 = scalar_lea.vmem [#allocation3], %s194
          %s196 = smul.u32 4, %s23
          %198 = vsyncadd %s192, 0
          %s199 = sadd.s32 %s25, %s196
          %s200 = smul.addr %s199, 4
          %s201 = scalar_lea.hbm %s0, %s200
          %s202 = sshll.u32 %s201, 4
          %s203 = int_to_ptr.hbm [resolvable:$true] %s202
          %s204 = sshll.u32 %s195, 4
          %s205 = int_to_ptr.vmem [resolvable:$true] %s204
          %210 = dma.hbm_to_vmem [thread:$0]  %s203, 256, %s205, %s192, 64, 64, 4
        $region28: #{tpu_custom_call.1} parent=23 // pred_fallthru
          _
      $region24: #{tpu_custom_call.1} parent=5 // pred_fallthru
        _
      %p211 = scmp.le.s32.totalorder 1, %s16
      %p212 = scmp.lt.s32.totalorder %s16, 3
      %p213 = pnand %p211, %p212
      %p214 = pneg %p213
      // Predicated region
      $region29: #{tpu_custom_call.1} parent=5 // pred_check
        _
      $region30: #{tpu_custom_call.1} parent=5 // pred_check_branch
        %216 = sbr.rel (%p213) target = $region32
      $region31: #{tpu_custom_call.1} parent=5 // pred_region
        %s217 = ssub.s32 %s16, 1
        %s218 = sand.u32 %s50, 1
        %s219 = scalar_lea.sflag [#allocation4], %s218
        %s220 = sand.u32 %s50, 1
        %s221 = smul.addr %s220, 16
        %s222 = scalar_lea.vmem [#allocation3], %s221
        // Predicated region
        $region33: #{tpu_custom_call.1} parent=31 // pred_check
          %p223 = pneg %p63
        $region34: #{tpu_custom_call.1} parent=31 // pred_check_branch
          %225 = sbr.rel (%p223) target = $region36
        $region35: #{tpu_custom_call.1} parent=31 // pred_region
          %227 = dma.done %s219, 256
        $region36: #{tpu_custom_call.1} parent=31 // pred_fallthru
          _
        // Predicated region
        $region37: #{tpu_custom_call.1} parent=31 // pred_check
          %p228 = pneg %p91
        $region38: #{tpu_custom_call.1} parent=31 // pred_check_branch
          %230 = sbr.rel (%p228) target = $region40
        $region39: #{tpu_custom_call.1} parent=31 // pred_region
          %232 = dma.done [#allocation7], 1024
        $region40: #{tpu_custom_call.1} parent=31 // pred_fallthru
          _
        %s233 = sand.u32 %s50, 1
        %s234 = scalar_lea.sflag [#allocation4], %s233
        %s235 = sand.u32 %s50, 1
        %s236 = smul.addr %s235, 16
        %s237 = scalar_lea.vmem [#allocation3], %s236
        %p238 = pneg %p63
        %p239 = pneg %p60
        %p240 = pneg %p91
        %p241 = pneg %p88
        %p242 = scmp.lt.s32.totalorder %s27, 0
        %s243 = scalar_select %p242, %s27, 0
        %s244 = scalar_lea.vmem %s2, %s243
        %p245 = pneg %p117
        %p246 = pneg %p114
        %p247 = pneg %p145
        %p248 = pneg %p142
        %s249 = sand.u32 %s132, 1
        %s250 = scalar_lea.sflag [#allocation5], %s249
        %s251 = sand.u32 %s132, 1
        %s252 = smul.addr %s251, 32
        %s253 = scalar_lea.vmem [#allocation8], %s252
        %s254 = smul.u32 4, %s26
        %s255 = smul.u32 16, %s28
        %p256 = scmp.lt.s32.totalorder %s27, 0
        %s257 = scalar_select %p256, %s27, 0
        %s258 = scalar_lea.vmem %s2, %s257
        %s259 = smul.u32 4, %s26
        %p260 = scmp.eq.s32.totalorder %s28, 0
        // Predicated region
        $region41: #{tpu_custom_call.1} parent=31 // pred_check
          %p261 = pneg %p260
        $region42: #{tpu_custom_call.1} parent=31 // pred_check_branch
          %263 = sbr.rel (%p261) target = $region44
        $region43: #{tpu_custom_call.1} parent=31 // pred_region
          %v264 = vld [vmem:[%s258] sm:$0x1]
          %v266 = vperm.slane %v264, 0
          %268 = vst [vmem:[#allocation2] sm:$0xff] %v266
          %269 = vst [vmem:[#allocation2 + $0x8] sm:$0xff] %v266
          %270 = vst [vmem:[#allocation2 + $0x10] sm:$0xff] %v266
          %271 = vst [vmem:[#allocation2 + $0x18] sm:$0xff] %v266
        $region44: #{tpu_custom_call.1} parent=31 // pred_fallthru
          _
        %v272 = vld [vmem:[#allocation2] sm:$0xff]
        %v273 = vld [vmem:[#allocation2 + $0x8] sm:$0xff]
        %v274 = vld [vmem:[#allocation2 + $0x10] sm:$0xff]
        %v275 = vld [vmem:[#allocation2 + $0x18] sm:$0xff]
        %v276 = vld [vmem:[%s222] sm:$0xf]
        %v277 = vld [vmem:[%s222 + $0x4] sm:$0xf]
        %v278 = vld [vmem:[%s222 + $0x8] sm:$0xf]
        %v279 = vld [vmem:[%s222 + $0xc] sm:$0xf]
        %v280 = vld [vmem:[#allocation6] sm:$0xf]
        %v281 = vld [vmem:[#allocation6 + $0x4] sm:$0xf]
        %v282 = vld [vmem:[#allocation6 + $0x8] sm:$0xf]
        %v283 = vld [vmem:[#allocation6 + $0xc] sm:$0xf]
        %v284 = vld [vmem:[#allocation6 + $0x10] sm:$0xf]
        %v285 = vld [vmem:[#allocation6 + $0x14] sm:$0xf]
        %v286 = vld [vmem:[#allocation6 + $0x18] sm:$0xf]
        %v287 = vld [vmem:[#allocation6 + $0x1c] sm:$0xf]
        %v288 = vld [vmem:[#allocation6 + $0x20] sm:$0xf]
        %v289 = vld [vmem:[#allocation6 + $0x24] sm:$0xf]
        %v290 = vld [vmem:[#allocation6 + $0x28] sm:$0xf]
        %v291 = vld [vmem:[#allocation6 + $0x2c] sm:$0xf]
        %v292 = vld [vmem:[#allocation6 + $0x30] sm:$0xf]
        %v293 = vld [vmem:[#allocation6 + $0x34] sm:$0xf]
        %v294 = vld [vmem:[#allocation6 + $0x38] sm:$0xf]
        %v295 = vld [vmem:[#allocation6 + $0x3c] sm:$0xf]
        %v300 = vunpack.c.l.b16 %v276
        %v301 = vunpack.c.l.b16 %v277
        %v302 = vunpack.c.l.b16 %v278
        %v303 = vunpack.c.l.b16 %v279
        %v304 = vpack.c.b16 %v301, %v300
        %v305 = vpack.c.b16 %v303, %v302
        %v324 = vunpack.c.l.b16 %v280
        %v325 = vunpack.c.l.b16 %v281
        %v326 = vunpack.c.l.b16 %v282
        %v327 = vunpack.c.l.b16 %v283
        %v328 = vunpack.c.l.b16 %v284
        %v329 = vunpack.c.l.b16 %v285
        %v330 = vunpack.c.l.b16 %v286
        %v331 = vunpack.c.l.b16 %v287
        %v332 = vunpack.c.l.b16 %v288
        %v333 = vunpack.c.l.b16 %v289
        %v334 = vunpack.c.l.b16 %v290
        %v335 = vunpack.c.l.b16 %v291
        %v336 = vunpack.c.l.b16 %v292
        %v337 = vunpack.c.l.b16 %v293
        %v338 = vunpack.c.l.b16 %v294
        %v339 = vunpack.c.l.b16 %v295
        %v340 = vpack.c.b16 %v325, %v324
        %v341 = vpack.c.b16 %v327, %v326
        %v342 = vpack.c.b16 %v329, %v328
        %v343 = vpack.c.b16 %v331, %v330
        %v344 = vpack.c.b16 %v333, %v332
        %v345 = vpack.c.b16 %v335, %v334
        %v346 = vpack.c.b16 %v337, %v336
        %v347 = vpack.c.b16 %v339, %v338
        %356 = vmatpush.bf16.msra.mxu0 %v347
        %357 = vmatpush.bf16.msra.mxu0 %v346
        %358 = vmatpush.bf16.msra.mxu0 %v345
        %359 = vmatpush.bf16.msra.mxu0 %v344
        %360 = vmatpush.bf16.msra.mxu0 %v343
        %361 = vmatpush.bf16.msra.mxu0 %v342
        %362 = vmatpush.bf16.msra.mxu0 %v341
        %363 = vmatpush.bf16.msra.mxu0 %v340
        %364 = vmatmul.bf16.gmra.mxu0 %v304
        %v365 = vpop.f32.mrf.mxu0
        %v366 = vadd.f32 0.0, %v365
        %v367 = vpop.f32.mrf.mxu0
        %v368 = vadd.f32 0.0, %v367
        %369 = vmatmul.bf16.gmra.mxu0 %v305
        %v370 = vpop.f32.mrf.mxu0
        %v371 = vadd.f32 0.0, %v370
        %v372 = vpop.f32.mrf.mxu0
        %v373 = vadd.f32 0.0, %v372
        %374 = vdwg.mxu0
        %v375 = vadd.f32 %v272, %v366
        %v376 = vadd.f32 %v273, %v368
        %v377 = vadd.f32 %v274, %v371
        %v378 = vadd.f32 %v275, %v373
        %379 = vst [vmem:[#allocation2] sm:$0xff] %v375
        %380 = vst [vmem:[#allocation2 + $0x8] sm:$0xff] %v376
        %381 = vst [vmem:[#allocation2 + $0x10] sm:$0xff] %v377
        %382 = vst [vmem:[#allocation2 + $0x18] sm:$0xff] %v378
        // Predicated region
        $region45: #{tpu_custom_call.1} parent=31 // pred_check
          %p383 = pneg %p260
        $region46: #{tpu_custom_call.1} parent=31 // pred_check_branch
          %385 = sbr.rel (%p383) target = $region48
        $region47: #{tpu_custom_call.1} parent=31 // pred_region
          %v386 = vld [vmem:[#allocation2] sm:$0xff]
          %v387 = vld [vmem:[#allocation2 + $0x8] sm:$0xff]
          %v388 = vld [vmem:[#allocation2 + $0x10] sm:$0xff]
          %v389 = vld [vmem:[#allocation2 + $0x18] sm:$0xff]
          %390 = vst [vmem:[%s253] sm:$0xff] %v386
          %391 = vst [vmem:[%s253 + $0x8] sm:$0xff] %v387
          %392 = vst [vmem:[%s253 + $0x10] sm:$0xff] %v388
          %393 = vst [vmem:[%s253 + $0x18] sm:$0xff] %v389
        $region48: #{tpu_custom_call.1} parent=31 // pred_fallthru
          _
        %s394 = sand.u32 %s132, 1
        %s395 = scalar_lea.sflag [#allocation5], %s394
        %s396 = sand.u32 %s132, 1
        %s397 = smul.addr %s396, 32
        %s398 = scalar_lea.vmem [#allocation8], %s397
        // Predicated region
        $region49: #{tpu_custom_call.1} parent=31 // pred_check
          %p399 = pneg %p142
        $region50: #{tpu_custom_call.1} parent=31 // pred_check_branch
          %401 = sbr.rel (%p399) target = $region52
        $region51: #{tpu_custom_call.1} parent=31 // pred_region
          %s402 = smul.u32 4, %s26
          %404 = vsyncadd %s395, 0
          %s405 = sadd.s32 %s27, %s402
          %s406 = smul.addr %s405, 8
          %s407 = scalar_lea.hbm %s3, %s406
          %s408 = sshll.u32 %s398, 4
          %s409 = int_to_ptr.vmem [resolvable:$true] %s408
          %s410 = sshll.u32 %s407, 4
          %s411 = int_to_ptr.hbm [resolvable:$true] %s410
          %416 = dma.vmem_to_hbm [thread:$0]  %s409, 512, %s411, %s395, 128, 128, 8
        $region52: #{tpu_custom_call.1} parent=31 // pred_fallthru
          _
      $region32: #{tpu_custom_call.1} parent=5 // pred_fallthru
        _
      %p417 = scmp.le.s32.totalorder 2, %s16
      // Predicated region
      $region53: #{tpu_custom_call.1} parent=5 // pred_check
        %p418 = pneg %p417
      $region54: #{tpu_custom_call.1} parent=5 // pred_check_branch
        %420 = sbr.rel (%p418) target = $region56
      $region55: #{tpu_custom_call.1} parent=5 // pred_region
        %s421 = ssub.s32 %s16, 2
        // Predicated region
        $region57: #{tpu_custom_call.1} parent=55 // pred_check
          %p422 = pneg %p148
        $region58: #{tpu_custom_call.1} parent=55 // pred_check_branch
          %424 = sbr.rel (%p422) target = $region60
        $region59: #{tpu_custom_call.1} parent=55 // pred_region
          %s425 = sand.u32 %s133, 1
          %s426 = scalar_lea.sflag [#allocation5], %s425
          %s427 = sand.u32 %s133, 1
          %s428 = smul.addr %s427, 32
          %s429 = scalar_lea.vmem [#allocation8], %s428
          %431 = dma.done %s426, 512
        $region60: #{tpu_custom_call.1} parent=55 // pred_fallthru
          _
      $region56: #{tpu_custom_call.1} parent=5 // pred_fallthru
        _
    $region6: #{tpu_custom_call.1} parent=1 // loop_footer
      %s20 = sadd.s32 1, %s16
    $region7: #{tpu_custom_call.1} parent=1 // loop_footer_branch
      %15 = sbr.rel target = $region3
    $region8: #{tpu_custom_call.1} parent=1 // loop_exit
      _
    %432 = vsyncpa [#allocation4], 1
    %s433 = scalar_lea.sflag [#allocation4], 1
    %434 = vsyncpa %s433, 1
    %435 = vsyncpa [#allocation7], 1
    %436 = vsyncpa [#allocation5], 1
    %s437 = scalar_lea.sflag [#allocation5], 1
    %438 = vsyncpa %s437, 1

</llo_original>
